<compile_context>
chip_gen: v5e
topology: v5e:2x2
jax: 0.10.0
libtpu: 0.0.40
codegen_flags: <defaults>
</compile_context>

<pallas_src>
import jax
import jax.numpy as jnp
from jax.experimental import pallas as pl
from jax.experimental.pallas import tpu as pltpu

EPS = 1e-5


def _batchnorm_kernel(x_ref, gamma_ref, beta_ref, o_ref):
    # x_ref: (N, C, HW) f32 in VMEM (native NCHW view: C on sublanes, HW on
    # lanes). gamma_ref / beta_ref: (C, 1) f32 columns.
    x = x_ref[...]
    n, c, hw = x.shape
    inv_l = 1.0 / (n * hw)

    # Pass 1: per-channel mean. Lane (XLU) reduce over HW, then the trivial
    # reduce over the leading batch axis.
    s1 = jnp.sum(x, axis=2, keepdims=True)              # (N, C, 1)
    mean = jnp.sum(s1, axis=0, keepdims=True) * inv_l   # (1, C, 1)

    # Pass 2: centered second moment (numerically robust, biased variance to
    # match PyTorch's normalization statistic).
    d = x - mean                                         # (N, C, HW)
    s2 = jnp.sum(d * d, axis=2, keepdims=True)           # (N, C, 1)
    var = jnp.sum(s2, axis=0, keepdims=True) * inv_l     # (1, C, 1)
    inv_std = jax.lax.rsqrt(var + EPS)                   # EUP rsqrt

    # Per-channel scale/shift applied to the already-centered data: one mul
    # and one add per element over the full tensor.
    scale = gamma_ref[...] * inv_std                      # (1, C, 1)
    o_ref[...] = (d * scale + beta_ref[...]).astype(o_ref.dtype)


@jax.jit
def batchnorm2d(x, gamma, beta):
    """BatchNorm2d forward with batch statistics.

    x: (N, C, H, W) float32, gamma/beta: (C,) float32.
    Returns (N, C, H, W) float32.
    """
    N, C, H, W = x.shape
    HW = H * W

    # Free views — no transpose, no data movement.
    x3 = x.reshape(N, C, HW).astype(jnp.float32)
    g2 = gamma.reshape(C, 1).astype(jnp.float32)
    b2 = beta.reshape(C, 1).astype(jnp.float32)

    out3 = pl.pallas_call(
        _batchnorm_kernel,
        out_shape=jax.ShapeDtypeStruct((N, C, HW), jnp.float32),
        grid=(1,),
        in_specs=[
            pl.BlockSpec((N, C, HW), lambda i: (0, 0, 0)),
            pl.BlockSpec((C, 1), lambda i: (0, 0)),
            pl.BlockSpec((C, 1), lambda i: (0, 0)),
        ],
        out_specs=pl.BlockSpec((N, C, HW), lambda i: (0, 0, 0)),
        compiler_params=pltpu.CompilerParams(
            dimension_semantics=("arbitrary",),
        ),
    )(x3, g2, b2)

    return out3.reshape(N, C, H, W)


if __name__ == "__main__":
    key = jax.random.PRNGKey(0)
    # Shape implied by the module: (1, 128, 7, 7); channel count fixed at 128.
    x = jax.random.normal(key, (1, 128, 7, 7), dtype=jnp.float32)

    # Deterministic parameters matching PyTorch BatchNorm2d default init.
    gamma = jnp.ones((128,), dtype=jnp.float32)
    beta = jnp.zeros((128,), dtype=jnp.float32)

    y = jax.block_until_ready(batchnorm2d(x, gamma, beta))

    # Sanity check vs. plain-JAX reference (batch-stats BN, biased variance).
    mean = jnp.mean(x, axis=(0, 2, 3), keepdims=True)
    var = jnp.mean((x - mean) ** 2, axis=(0, 2, 3), keepdims=True)
    ref = (x - mean) * jax.lax.rsqrt(var + EPS) * gamma.reshape(1, -1, 1, 1) \
        + beta.reshape(1, -1, 1, 1)
    assert jnp.max(jnp.abs(y - ref)) < 1e-4, "mismatch vs reference"

    print("KERNEL_OK")
</pallas_src>

<mosaic_0001>
module attributes {stable_mosaic.version = 11 : i64} {
  func.func @_batchnorm_kernel(%arg0: i32, %arg1: memref<1x128x49xf32, #tpu.memory_space<vmem>>, %arg2: memref<128x1xf32, #tpu.memory_space<vmem>>, %arg3: memref<128x1xf32, #tpu.memory_space<vmem>>, %arg4: memref<1x128x49xf32, #tpu.memory_space<vmem>>) attributes {dimension_semantics = [#tpu.dimension_semantics<arbitrary>], iteration_bounds = array<i64: 1>, scalar_prefetch = 0 : i64, scratch_operands = 0 : i64, tpu.core_type = #tpu.core_type<tc>, window_params = [{pipeline_mode = #tpu.pipeline_mode<synchronous>, transform_indices = @transform_0, window_bounds = array<i64: 1, 128, 49>}, {pipeline_mode = #tpu.pipeline_mode<synchronous>, transform_indices = @transform_1, window_bounds = array<i64: 128, 1>}, {pipeline_mode = #tpu.pipeline_mode<synchronous>, transform_indices = @transform_2, window_bounds = array<i64: 128, 1>}, {pipeline_mode = #tpu.pipeline_mode<synchronous>, transform_indices = @transform_3, window_bounds = array<i64: 1, 128, 49>}]} {
    %c0 = arith.constant 0 : index
    %c0_0 = arith.constant 0 : index
    %c0_1 = arith.constant 0 : index
    %0 = vector.load %arg1[%c0, %c0_0, %c0_1] : memref<1x128x49xf32, #tpu.memory_space<vmem>>, vector<1x128x49xf32>
    %cst = arith.constant dense<0.000000e+00> : vector<1x128xf32>
    %1 = vector.multi_reduction <add>, %0, %cst [2] : vector<1x128x49xf32> to vector<1x128xf32>
    %2 = vector.shape_cast %1 : vector<1x128xf32> to vector<1x128x1xf32>
    %cst_2 = arith.constant dense<0.000000e+00> : vector<128x1xf32>
    %3 = vector.multi_reduction <add>, %2, %cst_2 [0] : vector<1x128x1xf32> to vector<128x1xf32>
    %4 = vector.shape_cast %3 : vector<128x1xf32> to vector<1x128x1xf32>
    %cst_3 = arith.constant 0.0204081628 : f32
    %5 = vector.broadcast %cst_3 : f32 to vector<1x128x1xf32>
    %6 = arith.mulf %4, %5 : vector<1x128x1xf32>
    %7 = vector.broadcast %6 : vector<1x128x1xf32> to vector<1x128x49xf32>
    %8 = arith.subf %0, %7 : vector<1x128x49xf32>
    %9 = arith.mulf %8, %8 : vector<1x128x49xf32>
    %cst_4 = arith.constant dense<0.000000e+00> : vector<1x128xf32>
    %10 = vector.multi_reduction <add>, %9, %cst_4 [2] : vector<1x128x49xf32> to vector<1x128xf32>
    %11 = vector.shape_cast %10 : vector<1x128xf32> to vector<1x128x1xf32>
    %cst_5 = arith.constant dense<0.000000e+00> : vector<128x1xf32>
    %12 = vector.multi_reduction <add>, %11, %cst_5 [0] : vector<1x128x1xf32> to vector<128x1xf32>
    %13 = vector.shape_cast %12 : vector<128x1xf32> to vector<1x128x1xf32>
    %cst_6 = arith.constant 0.0204081628 : f32
    %14 = vector.broadcast %cst_6 : f32 to vector<1x128x1xf32>
    %15 = arith.mulf %13, %14 : vector<1x128x1xf32>
    %cst_7 = arith.constant 9.99999974E-6 : f32
    %16 = vector.broadcast %cst_7 : f32 to vector<1x128x1xf32>
    %17 = arith.addf %15, %16 : vector<1x128x1xf32>
    %18 = math.rsqrt %17 : vector<1x128x1xf32>
    %c0_8 = arith.constant 0 : index
    %c0_9 = arith.constant 0 : index
    %19 = vector.load %arg2[%c0_8, %c0_9] : memref<128x1xf32, #tpu.memory_space<vmem>>, vector<128x1xf32>
    %20 = vector.shape_cast %19 : vector<128x1xf32> to vector<1x128x1xf32>
    %21 = arith.mulf %20, %18 : vector<1x128x1xf32>
    %22 = vector.broadcast %21 : vector<1x128x1xf32> to vector<1x128x49xf32>
    %23 = arith.mulf %8, %22 : vector<1x128x49xf32>
    %c0_10 = arith.constant 0 : index
    %c0_11 = arith.constant 0 : index
    %24 = vector.load %arg3[%c0_10, %c0_11] : memref<128x1xf32, #tpu.memory_space<vmem>>, vector<128x1xf32>
    %25 = vector.shape_cast %24 : vector<128x1xf32> to vector<1x128x1xf32>
    %26 = vector.broadcast %25 : vector<1x128x1xf32> to vector<1x128x49xf32>
    %27 = arith.addf %23, %26 : vector<1x128x49xf32>
    %c0_12 = arith.constant 0 : index
    %c0_13 = arith.constant 0 : index
    %c0_14 = arith.constant 0 : index
    %28 = vector.load %arg4[%c0_12, %c0_13, %c0_14] : memref<1x128x49xf32, #tpu.memory_space<vmem>>, vector<1x128x49xf32>
    tpu.vector_store %arg4[%c0_12, %c0_13, %c0_14], %27 {strides = array<i32>} : memref<1x128x49xf32, #tpu.memory_space<vmem>>, vector<1x128x49xf32>,
    return
  }
  func.func @transform_0(%arg0: i32) -> (i32, i32, i32) {
    %c0_i32 = arith.constant 0 : i32
    %c0_i32_0 = arith.constant 0 : i32
    %c0_i32_1 = arith.constant 0 : i32
    %c0_i32_2 = arith.constant 0 : i32
    return %c0_i32, %c0_i32_0, %c0_i32_1 : i32, i32, i32
  }
  func.func @transform_1(%arg0: i32) -> (i32, i32) {
    %c0_i32 = arith.constant 0 : i32
    %c0_i32_0 = arith.constant 0 : i32
    %c0_i32_1 = arith.constant 0 : i32
    return %c0_i32, %c0_i32_0 : i32, i32
  }
  func.func @transform_2(%arg0: i32) -> (i32, i32) {
    %c0_i32 = arith.constant 0 : i32
    %c0_i32_0 = arith.constant 0 : i32
    %c0_i32_1 = arith.constant 0 : i32
    return %c0_i32, %c0_i32_0 : i32, i32
  }
  func.func @transform_3(%arg0: i32) -> (i32, i32, i32) {
    %c0_i32 = arith.constant 0 : i32
    %c0_i32_0 = arith.constant 0 : i32
    %c0_i32_1 = arith.constant 0 : i32
    %c0_i32_2 = arith.constant 0 : i32
    return %c0_i32, %c0_i32_0, %c0_i32_1 : i32, i32, i32
  }
}

</mosaic_0001>

<llo_original>
// kernel: batchnorm2d.1
$region0: #{batchnorm2d.1}
  #allocation0 [shape = 'u32[]', space=smem, size = 0x4, offset = 0x4, fixed_abs, tag = 'smem constant byte address 0x4 - core index']
  #allocation1 [shape = 'u32[72,128]{1,0:T(1,128)}', space=vmem, size = 0x9000, scoped, tag = 'internal scratch']
  %s0 = inlined_call_operand.vmem [shape: f32[1,128,49], index: 0, kind: input, shape index: {}]
  %s1 = inlined_call_operand.vmem [shape: f32[128,1], index: 1, kind: input, shape index: {}]
  %s2 = inlined_call_operand.vmem [shape: f32[128,1], index: 2, kind: input, shape index: {}]
  %s3 = inlined_call_operand.vmem [shape: f32[1,128,49], index: 3, kind: output, shape index: {}]
  %s4 = sld [smem:[#allocation0]]
  $region22: #{batchnorm2d.1} parent=0
    _
  %s6 = ssub.s32 1, %s4
  %s7 = scalar_select 0, %s6, %s4
  // Predicated region
  $region2: #{batchnorm2d.1} parent=0 // pred_check
    _
  $region3: #{batchnorm2d.1} parent=0 // pred_check_branch
    %9 = sbr.rel (0) target = $region5
  $region4: #{batchnorm2d.1} parent=0 // pred_region
    _
  $region5: #{batchnorm2d.1} parent=0 // pred_fallthru
    _
  // Predicated region
  $region6: #{batchnorm2d.1} parent=0 // pred_check
    _
  $region7: #{batchnorm2d.1} parent=0 // pred_check_branch
    %11 = sbr.rel (0) target = $region9
  $region8: #{batchnorm2d.1} parent=0 // pred_region
    _
  $region9: #{batchnorm2d.1} parent=0 // pred_fallthru
    _
  // Predicated region
  $region10: #{batchnorm2d.1} parent=0 // pred_check
    _
  $region11: #{batchnorm2d.1} parent=0 // pred_check_branch
    %13 = sbr.rel (0) target = $region13
  $region12: #{batchnorm2d.1} parent=0 // pred_region
    _
  $region13: #{batchnorm2d.1} parent=0 // pred_fallthru
    _
  %v14 = vld [vmem:[%s0] sm:$0xff]
  %v15 = vld [vmem:[%s0 + $0x8] sm:$0xff]
  %v16 = vld [vmem:[%s0 + $0x10] sm:$0xff]
  %v17 = vld [vmem:[%s0 + $0x18] sm:$0xff]
  %v18 = vld [vmem:[%s0 + $0x20] sm:$0xff]
  %v19 = vld [vmem:[%s0 + $0x28] sm:$0xff]
  %v20 = vld [vmem:[%s0 + $0x30] sm:$0xff]
  %v21 = vld [vmem:[%s0 + $0x38] sm:$0xff]
  %v22 = vld [vmem:[%s0 + $0x40] sm:$0xff]
  %v23 = vld [vmem:[%s0 + $0x48] sm:$0xff]
  %v24 = vld [vmem:[%s0 + $0x50] sm:$0xff]
  %v25 = vld [vmem:[%s0 + $0x58] sm:$0xff]
  %v26 = vld [vmem:[%s0 + $0x60] sm:$0xff]
  %v27 = vld [vmem:[%s0 + $0x68] sm:$0xff]
  %v28 = vld [vmem:[%s0 + $0x70] sm:$0xff]
  %v29 = vld [vmem:[%s0 + $0x78] sm:$0xff]
  %vm30 = vcmask 400384
  %v31 = vsel %vm30, %v14, 0.0
  %32 = vadd.xlane.f32.xlu0 %v31
  %v33 = vpop.xlane.xlu0 %32
  %v34 = vsel %vm30, %v15, 0.0
  %35 = vadd.xlane.f32.xlu0 %v34
  %v36 = vpop.xlane.xlu0 %35
  %v37 = vsel %vm30, %v16, 0.0
  %38 = vadd.xlane.f32.xlu0 %v37
  %v39 = vpop.xlane.xlu0 %38
  %v40 = vsel %vm30, %v17, 0.0
  %41 = vadd.xlane.f32.xlu0 %v40
  %v42 = vpop.xlane.xlu0 %41
  %v43 = vsel %vm30, %v18, 0.0
  %44 = vadd.xlane.f32.xlu0 %v43
  %v45 = vpop.xlane.xlu0 %44
  %v46 = vsel %vm30, %v19, 0.0
  %47 = vadd.xlane.f32.xlu0 %v46
  %v48 = vpop.xlane.xlu0 %47
  %v49 = vsel %vm30, %v20, 0.0
  %50 = vadd.xlane.f32.xlu0 %v49
  %v51 = vpop.xlane.xlu0 %50
  %v52 = vsel %vm30, %v21, 0.0
  %53 = vadd.xlane.f32.xlu0 %v52
  %v54 = vpop.xlane.xlu0 %53
  %v55 = vsel %vm30, %v22, 0.0
  %56 = vadd.xlane.f32.xlu0 %v55
  %v57 = vpop.xlane.xlu0 %56
  %v58 = vsel %vm30, %v23, 0.0
  %59 = vadd.xlane.f32.xlu0 %v58
  %v60 = vpop.xlane.xlu0 %59
  %v61 = vsel %vm30, %v24, 0.0
  %62 = vadd.xlane.f32.xlu0 %v61
  %v63 = vpop.xlane.xlu0 %62
  %v64 = vsel %vm30, %v25, 0.0
  %65 = vadd.xlane.f32.xlu0 %v64
  %v66 = vpop.xlane.xlu0 %65
  %v67 = vsel %vm30, %v26, 0.0
  %68 = vadd.xlane.f32.xlu0 %v67
  %v69 = vpop.xlane.xlu0 %68
  %v70 = vsel %vm30, %v27, 0.0
  %71 = vadd.xlane.f32.xlu0 %v70
  %v72 = vpop.xlane.xlu0 %71
  %v73 = vsel %vm30, %v28, 0.0
  %74 = vadd.xlane.f32.xlu0 %v73
  %v75 = vpop.xlane.xlu0 %74
  %v76 = vsel %vm30, %v29, 0.0
  %77 = vadd.xlane.f32.xlu0 %v76
  %v78 = vpop.xlane.xlu0 %77
  %v79 = vadd.f32 %v33, 0.0
  %v80 = vadd.f32 %v36, 0.0
  %v81 = vadd.f32 %v39, 0.0
  %v82 = vadd.f32 %v42, 0.0
  %v83 = vadd.f32 %v45, 0.0
  %v84 = vadd.f32 %v48, 0.0
  %v85 = vadd.f32 %v51, 0.0
  %v86 = vadd.f32 %v54, 0.0
  %v87 = vadd.f32 %v57, 0.0
  %v88 = vadd.f32 %v60, 0.0
  %v89 = vadd.f32 %v63, 0.0
  %v90 = vadd.f32 %v66, 0.0
  %v91 = vadd.f32 %v69, 0.0
  %v92 = vadd.f32 %v72, 0.0
  %v93 = vadd.f32 %v75, 0.0
  %v94 = vadd.f32 %v78, 0.0
  %v95 = vmul.f32 %v79, 0.020408163
  %v96 = vmul.f32 %v80, 0.020408163
  %v97 = vmul.f32 %v81, 0.020408163
  %v98 = vmul.f32 %v82, 0.020408163
  %v99 = vmul.f32 %v83, 0.020408163
  %v100 = vmul.f32 %v84, 0.020408163
  %v101 = vmul.f32 %v85, 0.020408163
  %v102 = vmul.f32 %v86, 0.020408163
  %v103 = vmul.f32 %v87, 0.020408163
  %v104 = vmul.f32 %v88, 0.020408163
  %v105 = vmul.f32 %v89, 0.020408163
  %v106 = vmul.f32 %v90, 0.020408163
  %v107 = vmul.f32 %v91, 0.020408163
  %v108 = vmul.f32 %v92, 0.020408163
  %v109 = vmul.f32 %v93, 0.020408163
  %v110 = vmul.f32 %v94, 0.020408163
  %v111 = vsub.f32 %v14, %v95
  %v112 = vsub.f32 %v15, %v96
  %v113 = vsub.f32 %v16, %v97
  %v114 = vsub.f32 %v17, %v98
  %v115 = vsub.f32 %v18, %v99
  %v116 = vsub.f32 %v19, %v100
  %v117 = vsub.f32 %v20, %v101
  %v118 = vsub.f32 %v21, %v102
  %v119 = vsub.f32 %v22, %v103
  %v120 = vsub.f32 %v23, %v104
  %v121 = vsub.f32 %v24, %v105
  %v122 = vsub.f32 %v25, %v106
  %v123 = vsub.f32 %v26, %v107
  %v124 = vsub.f32 %v27, %v108
  %v125 = vsub.f32 %v28, %v109
  %v126 = vsub.f32 %v29, %v110
  %v127 = vmul.f32 %v111, %v111
  %v128 = vmul.f32 %v112, %v112
  %v129 = vmul.f32 %v113, %v113
  %v130 = vmul.f32 %v114, %v114
  %v131 = vmul.f32 %v115, %v115
  %v132 = vmul.f32 %v116, %v116
  %v133 = vmul.f32 %v117, %v117
  %v134 = vmul.f32 %v118, %v118
  %v135 = vmul.f32 %v119, %v119
  %v136 = vmul.f32 %v120, %v120
  %v137 = vmul.f32 %v121, %v121
  %v138 = vmul.f32 %v122, %v122
  %v139 = vmul.f32 %v123, %v123
  %v140 = vmul.f32 %v124, %v124
  %v141 = vmul.f32 %v125, %v125
  %v142 = vmul.f32 %v126, %v126
  %v143 = vsel %vm30, %v127, 0.0
  %144 = vadd.xlane.f32.xlu0 %v143
  %v145 = vpop.xlane.xlu0 %144
  %v146 = vsel %vm30, %v128, 0.0
  %147 = vadd.xlane.f32.xlu0 %v146
  %v148 = vpop.xlane.xlu0 %147
  %v149 = vsel %vm30, %v129, 0.0
  %150 = vadd.xlane.f32.xlu0 %v149
  %v151 = vpop.xlane.xlu0 %150
  %v152 = vsel %vm30, %v130, 0.0
  %153 = vadd.xlane.f32.xlu0 %v152
  %v154 = vpop.xlane.xlu0 %153
  %v155 = vsel %vm30, %v131, 0.0
  %156 = vadd.xlane.f32.xlu0 %v155
  %v157 = vpop.xlane.xlu0 %156
  %v158 = vsel %vm30, %v132, 0.0
  %159 = vadd.xlane.f32.xlu0 %v158
  %v160 = vpop.xlane.xlu0 %159
  %v161 = vsel %vm30, %v133, 0.0
  %162 = vadd.xlane.f32.xlu0 %v161
  %v163 = vpop.xlane.xlu0 %162
  %v164 = vsel %vm30, %v134, 0.0
  %165 = vadd.xlane.f32.xlu0 %v164
  %v166 = vpop.xlane.xlu0 %165
  %v167 = vsel %vm30, %v135, 0.0
  %168 = vadd.xlane.f32.xlu0 %v167
  %v169 = vpop.xlane.xlu0 %168
  %v170 = vsel %vm30, %v136, 0.0
  %171 = vadd.xlane.f32.xlu0 %v170
  %v172 = vpop.xlane.xlu0 %171
  %v173 = vsel %vm30, %v137, 0.0
  %174 = vadd.xlane.f32.xlu0 %v173
  %v175 = vpop.xlane.xlu0 %174
  %v176 = vsel %vm30, %v138, 0.0
  %177 = vadd.xlane.f32.xlu0 %v176
  %v178 = vpop.xlane.xlu0 %177
  %v179 = vsel %vm30, %v139, 0.0
  %180 = vadd.xlane.f32.xlu0 %v179
  %v181 = vpop.xlane.xlu0 %180
  %v182 = vsel %vm30, %v140, 0.0
  %183 = vadd.xlane.f32.xlu0 %v182
  %v184 = vpop.xlane.xlu0 %183
  %v185 = vsel %vm30, %v141, 0.0
  %186 = vadd.xlane.f32.xlu0 %v185
  %v187 = vpop.xlane.xlu0 %186
  %v188 = vsel %vm30, %v142, 0.0
  %189 = vadd.xlane.f32.xlu0 %v188
  %v190 = vpop.xlane.xlu0 %189
  %v191 = vadd.f32 %v145, 0.0
  %v192 = vadd.f32 %v148, 0.0
  %v193 = vadd.f32 %v151, 0.0
  %v194 = vadd.f32 %v154, 0.0
  %v195 = vadd.f32 %v157, 0.0
  %v196 = vadd.f32 %v160, 0.0
  %v197 = vadd.f32 %v163, 0.0
  %v198 = vadd.f32 %v166, 0.0
  %v199 = vadd.f32 %v169, 0.0
  %v200 = vadd.f32 %v172, 0.0
  %v201 = vadd.f32 %v175, 0.0
  %v202 = vadd.f32 %v178, 0.0
  %v203 = vadd.f32 %v181, 0.0
  %v204 = vadd.f32 %v184, 0.0
  %v205 = vadd.f32 %v187, 0.0
  %v206 = vadd.f32 %v190, 0.0
  %v207 = vmul.f32 %v191, 0.020408163
  %v208 = vmul.f32 %v192, 0.020408163
  %v209 = vmul.f32 %v193, 0.020408163
  %v210 = vmul.f32 %v194, 0.020408163
  %v211 = vmul.f32 %v195, 0.020408163
  %v212 = vmul.f32 %v196, 0.020408163
  %v213 = vmul.f32 %v197, 0.020408163
  %v214 = vmul.f32 %v198, 0.020408163
  %v215 = vmul.f32 %v199, 0.020408163
  %v216 = vmul.f32 %v200, 0.020408163
  %v217 = vmul.f32 %v201, 0.020408163
  %v218 = vmul.f32 %v202, 0.020408163
  %v219 = vmul.f32 %v203, 0.020408163
  %v220 = vmul.f32 %v204, 0.020408163
  %v221 = vmul.f32 %v205, 0.020408163
  %v222 = vmul.f32 %v206, 0.020408163
  %v223 = vadd.f32 %v207, 1e-05
  %v224 = vadd.f32 %v208, 1e-05
  %v225 = vadd.f32 %v209, 1e-05
  %v226 = vadd.f32 %v210, 1e-05
  %v227 = vadd.f32 %v211, 1e-05
  %v228 = vadd.f32 %v212, 1e-05
  %v229 = vadd.f32 %v213, 1e-05
  %v230 = vadd.f32 %v214, 1e-05
  %v231 = vadd.f32 %v215, 1e-05
  %v232 = vadd.f32 %v216, 1e-05
  %v233 = vadd.f32 %v217, 1e-05
  %v234 = vadd.f32 %v218, 1e-05
  %v235 = vadd.f32 %v219, 1e-05
  %v236 = vadd.f32 %v220, 1e-05
  %v237 = vadd.f32 %v221, 1e-05
  %v238 = vadd.f32 %v222, 1e-05
  %v239 = vrsqrt.pop %v223
  %v240 = vmul.f32 %v239, %v223
  %v241 = vmul.f32 %v240, %v239
  %v242 = vmul.f32 0.5, %v241
  %v243 = vsub.f32 1.5, %v242
  %v244 = vmul.f32 %v239, %v243
  %vm245 = vweird.f32 %v223
  %vm246 = vweird.f32 %v239
  %vm247 = vmor %vm245, %vm246
  %v248 = vsel %vm247, %v239, %v244
  %v249 = vrsqrt.pop %v224
  %v250 = vmul.f32 %v249, %v224
  %v251 = vmul.f32 %v250, %v249
  %v252 = vmul.f32 0.5, %v251
  %v253 = vsub.f32 1.5, %v252
  %v254 = vmul.f32 %v249, %v253
  %vm255 = vweird.f32 %v224
  %vm256 = vweird.f32 %v249
  %vm257 = vmor %vm255, %vm256
  %v258 = vsel %vm257, %v249, %v254
  %v259 = vrsqrt.pop %v225
  %v260 = vmul.f32 %v259, %v225
  %v261 = vmul.f32 %v260, %v259
  %v262 = vmul.f32 0.5, %v261
  %v263 = vsub.f32 1.5, %v262
  %v264 = vmul.f32 %v259, %v263
  %vm265 = vweird.f32 %v225
  %vm266 = vweird.f32 %v259
  %vm267 = vmor %vm265, %vm266
  %v268 = vsel %vm267, %v259, %v264
  %v269 = vrsqrt.pop %v226
  %v270 = vmul.f32 %v269, %v226
  %v271 = vmul.f32 %v270, %v269
  %v272 = vmul.f32 0.5, %v271
  %v273 = vsub.f32 1.5, %v272
  %v274 = vmul.f32 %v269, %v273
  %vm275 = vweird.f32 %v226
  %vm276 = vweird.f32 %v269
  %vm277 = vmor %vm275, %vm276
  %v278 = vsel %vm277, %v269, %v274
  %v279 = vrsqrt.pop %v227
  %v280 = vmul.f32 %v279, %v227
  %v281 = vmul.f32 %v280, %v279
  %v282 = vmul.f32 0.5, %v281
  %v283 = vsub.f32 1.5, %v282
  %v284 = vmul.f32 %v279, %v283
  %vm285 = vweird.f32 %v227
  %vm286 = vweird.f32 %v279
  %vm287 = vmor %vm285, %vm286
  %v288 = vsel %vm287, %v279, %v284
  %v289 = vrsqrt.pop %v228
  %v290 = vmul.f32 %v289, %v228
  %v291 = vmul.f32 %v290, %v289
  %v292 = vmul.f32 0.5, %v291
  %v293 = vsub.f32 1.5, %v292
  %v294 = vmul.f32 %v289, %v293
  %vm295 = vweird.f32 %v228
  %vm296 = vweird.f32 %v289
  %vm297 = vmor %vm295, %vm296
  %v298 = vsel %vm297, %v289, %v294
  %v299 = vrsqrt.pop %v229
  %v300 = vmul.f32 %v299, %v229
  %v301 = vmul.f32 %v300, %v299
  %v302 = vmul.f32 0.5, %v301
  %v303 = vsub.f32 1.5, %v302
  %v304 = vmul.f32 %v299, %v303
  %vm305 = vweird.f32 %v229
  %vm306 = vweird.f32 %v299
  %vm307 = vmor %vm305, %vm306
  %v308 = vsel %vm307, %v299, %v304
  %v309 = vrsqrt.pop %v230
  %v310 = vmul.f32 %v309, %v230
  %v311 = vmul.f32 %v310, %v309
  %v312 = vmul.f32 0.5, %v311
  %v313 = vsub.f32 1.5, %v312
  %v314 = vmul.f32 %v309, %v313
  %vm315 = vweird.f32 %v230
  %vm316 = vweird.f32 %v309
  %vm317 = vmor %vm315, %vm316
  %v318 = vsel %vm317, %v309, %v314
  %v319 = vrsqrt.pop %v231
  %v320 = vmul.f32 %v319, %v231
  %v321 = vmul.f32 %v320, %v319
  %v322 = vmul.f32 0.5, %v321
  %v323 = vsub.f32 1.5, %v322
  %v324 = vmul.f32 %v319, %v323
  %vm325 = vweird.f32 %v231
  %vm326 = vweird.f32 %v319
  %vm327 = vmor %vm325, %vm326
  %v328 = vsel %vm327, %v319, %v324
  %v329 = vrsqrt.pop %v232
  %v330 = vmul.f32 %v329, %v232
  %v331 = vmul.f32 %v330, %v329
  %v332 = vmul.f32 0.5, %v331
  %v333 = vsub.f32 1.5, %v332
  %v334 = vmul.f32 %v329, %v333
  %vm335 = vweird.f32 %v232
  %vm336 = vweird.f32 %v329
  %vm337 = vmor %vm335, %vm336
  %v338 = vsel %vm337, %v329, %v334
  %v339 = vrsqrt.pop %v233
  %v340 = vmul.f32 %v339, %v233
  %v341 = vmul.f32 %v340, %v339
  %v342 = vmul.f32 0.5, %v341
  %v343 = vsub.f32 1.5, %v342
  %v344 = vmul.f32 %v339, %v343
  %vm345 = vweird.f32 %v233
  %vm346 = vweird.f32 %v339
  %vm347 = vmor %vm345, %vm346
  %v348 = vsel %vm347, %v339, %v344
  %v349 = vrsqrt.pop %v234
  %v350 = vmul.f32 %v349, %v234
  %v351 = vmul.f32 %v350, %v349
  %v352 = vmul.f32 0.5, %v351
  %v353 = vsub.f32 1.5, %v352
  %v354 = vmul.f32 %v349, %v353
  %vm355 = vweird.f32 %v234
  %vm356 = vweird.f32 %v349
  %vm357 = vmor %vm355, %vm356
  %v358 = vsel %vm357, %v349, %v354
  %v359 = vrsqrt.pop %v235
  %v360 = vmul.f32 %v359, %v235
  %v361 = vmul.f32 %v360, %v359
  %v362 = vmul.f32 0.5, %v361
  %v363 = vsub.f32 1.5, %v362
  %v364 = vmul.f32 %v359, %v363
  %vm365 = vweird.f32 %v235
  %vm366 = vweird.f32 %v359
  %vm367 = vmor %vm365, %vm366
  %v368 = vsel %vm367, %v359, %v364
  %v369 = vrsqrt.pop %v236
  %v370 = vmul.f32 %v369, %v236
  %v371 = vmul.f32 %v370, %v369
  %v372 = vmul.f32 0.5, %v371
  %v373 = vsub.f32 1.5, %v372
  %v374 = vmul.f32 %v369, %v373
  %vm375 = vweird.f32 %v236
  %vm376 = vweird.f32 %v369
  %vm377 = vmor %vm375, %vm376
  %v378 = vsel %vm377, %v369, %v374
  %v379 = vrsqrt.pop %v237
  %v380 = vmul.f32 %v379, %v237
  %v381 = vmul.f32 %v380, %v379
  %v382 = vmul.f32 0.5, %v381
  %v383 = vsub.f32 1.5, %v382
  %v384 = vmul.f32 %v379, %v383
  %vm385 = vweird.f32 %v237
  %vm386 = vweird.f32 %v379
  %vm387 = vmor %vm385, %vm386
  %v388 = vsel %vm387, %v379, %v384
  %v389 = vrsqrt.pop %v238
  %v390 = vmul.f32 %v389, %v238
  %v391 = vmul.f32 %v390, %v389
  %v392 = vmul.f32 0.5, %v391
  %v393 = vsub.f32 1.5, %v392
  %v394 = vmul.f32 %v389, %v393
  %vm395 = vweird.f32 %v238
  %vm396 = vweird.f32 %v389
  %vm397 = vmor %vm395, %vm396
  %v398 = vsel %vm397, %v389, %v394
  %v399 = vld [vmem:[%s1] sm:$0xff]
  %v400 = vld [vmem:[%s1 + $0x8] sm:$0xff]
  %v401 = vld [vmem:[%s1 + $0x10] sm:$0xff]
  %v402 = vld [vmem:[%s1 + $0x18] sm:$0xff]
  %v403 = vld [vmem:[%s1 + $0x20] sm:$0xff]
  %v404 = vld [vmem:[%s1 + $0x28] sm:$0xff]
  %v405 = vld [vmem:[%s1 + $0x30] sm:$0xff]
  %v406 = vld [vmem:[%s1 + $0x38] sm:$0xff]
  %v407 = vld [vmem:[%s1 + $0x40] sm:$0xff]
  %v408 = vld [vmem:[%s1 + $0x48] sm:$0xff]
  %v409 = vld [vmem:[%s1 + $0x50] sm:$0xff]
  %v410 = vld [vmem:[%s1 + $0x58] sm:$0xff]
  %v411 = vld [vmem:[%s1 + $0x60] sm:$0xff]
  %v412 = vld [vmem:[%s1 + $0x68] sm:$0xff]
  %v413 = vld [vmem:[%s1 + $0x70] sm:$0xff]
  %v414 = vld [vmem:[%s1 + $0x78] sm:$0xff]
  %v415 = vmul.f32 %v399, %v248
  %v416 = vmul.f32 %v400, %v258
  %v417 = vmul.f32 %v401, %v268
  %v418 = vmul.f32 %v402, %v278
  %v419 = vmul.f32 %v403, %v288
  %v420 = vmul.f32 %v404, %v298
  %v421 = vmul.f32 %v405, %v308
  %v422 = vmul.f32 %v406, %v318
  %v423 = vmul.f32 %v407, %v328
  %v424 = vmul.f32 %v408, %v338
  %v425 = vmul.f32 %v409, %v348
  %v426 = vmul.f32 %v410, %v358
  %v427 = vmul.f32 %v411, %v368
  %v428 = vmul.f32 %v412, %v378
  %v429 = vmul.f32 %v413, %v388
  %v430 = vmul.f32 %v414, %v398
  %432 = vset.pattern.permute.xlu0 0
  %433 = vperm.xlu0 %432, %v415
  %v434 = vpop.permute.xlu0 %433
  %437 = vset.pattern.permute.xlu0 0
  %438 = vperm.xlu0 %437, %v416
  %v439 = vpop.permute.xlu0 %438
  %442 = vset.pattern.permute.xlu0 0
  %443 = vperm.xlu0 %442, %v417
  %v444 = vpop.permute.xlu0 %443
  %447 = vset.pattern.permute.xlu0 0
  %448 = vperm.xlu0 %447, %v418
  %v449 = vpop.permute.xlu0 %448
  %452 = vset.pattern.permute.xlu0 0
  %453 = vperm.xlu0 %452, %v419
  %v454 = vpop.permute.xlu0 %453
  %457 = vset.pattern.permute.xlu0 0
  %458 = vperm.xlu0 %457, %v420
  %v459 = vpop.permute.xlu0 %458
  %462 = vset.pattern.permute.xlu0 0
  %463 = vperm.xlu0 %462, %v421
  %v464 = vpop.permute.xlu0 %463
  %467 = vset.pattern.permute.xlu0 0
  %468 = vperm.xlu0 %467, %v422
  %v469 = vpop.permute.xlu0 %468
  %472 = vset.pattern.permute.xlu0 0
  %473 = vperm.xlu0 %472, %v423
  %v474 = vpop.permute.xlu0 %473
  %477 = vset.pattern.permute.xlu0 0
  %478 = vperm.xlu0 %477, %v424
  %v479 = vpop.permute.xlu0 %478
  %482 = vset.pattern.permute.xlu0 0
  %483 = vperm.xlu0 %482, %v425
  %v484 = vpop.permute.xlu0 %483
  %487 = vset.pattern.permute.xlu0 0
  %488 = vperm.xlu0 %487, %v426
  %v489 = vpop.permute.xlu0 %488
  %492 = vset.pattern.permute.xlu0 0
  %493 = vperm.xlu0 %492, %v427
  %v494 = vpop.permute.xlu0 %493
  %497 = vset.pattern.permute.xlu0 0
  %498 = vperm.xlu0 %497, %v428
  %v499 = vpop.permute.xlu0 %498
  %502 = vset.pattern.permute.xlu0 0
  %503 = vperm.xlu0 %502, %v429
  %v504 = vpop.permute.xlu0 %503
  %507 = vset.pattern.permute.xlu0 0
  %508 = vperm.xlu0 %507, %v430
  %v509 = vpop.permute.xlu0 %508
  %v511 = vmul.f32 %v111, %v434
  %v512 = vmul.f32 %v112, %v439
  %v513 = vmul.f32 %v113, %v444
  %v514 = vmul.f32 %v114, %v449
  %v515 = vmul.f32 %v115, %v454
  %v516 = vmul.f32 %v116, %v459
  %v517 = vmul.f32 %v117, %v464
  %v518 = vmul.f32 %v118, %v469
  %v519 = vmul.f32 %v119, %v474
  %v520 = vmul.f32 %v120, %v479
  %v521 = vmul.f32 %v121, %v484
  %v522 = vmul.f32 %v122, %v489
  %v523 = vmul.f32 %v123, %v494
  %v524 = vmul.f32 %v124, %v499
  %v525 = vmul.f32 %v125, %v504
  %v526 = vmul.f32 %v126, %v509
  %v527 = vld [vmem:[%s2] sm:$0xff]
  %v528 = vld [vmem:[%s2 + $0x8] sm:$0xff]
  %v529 = vld [vmem:[%s2 + $0x10] sm:$0xff]
  %v530 = vld [vmem:[%s2 + $0x18] sm:$0xff]
  %v531 = vld [vmem:[%s2 + $0x20] sm:$0xff]
  %v532 = vld [vmem:[%s2 + $0x28] sm:$0xff]
  %v533 = vld [vmem:[%s2 + $0x30] sm:$0xff]
  %v534 = vld [vmem:[%s2 + $0x38] sm:$0xff]
  %v535 = vld [vmem:[%s2 + $0x40] sm:$0xff]
  %v536 = vld [vmem:[%s2 + $0x48] sm:$0xff]
  %v537 = vld [vmem:[%s2 + $0x50] sm:$0xff]
  %v538 = vld [vmem:[%s2 + $0x58] sm:$0xff]
  %v539 = vld [vmem:[%s2 + $0x60] sm:$0xff]
  %v540 = vld [vmem:[%s2 + $0x68] sm:$0xff]
  %v541 = vld [vmem:[%s2 + $0x70] sm:$0xff]
  %v542 = vld [vmem:[%s2 + $0x78] sm:$0xff]
  %544 = vset.pattern.permute.xlu0 0
  %545 = vperm.xlu0 %544, %v527
  %v546 = vpop.permute.xlu0 %545
  %549 = vset.pattern.permute.xlu0 0
  %550 = vperm.xlu0 %549, %v528
  %v551 = vpop.permute.xlu0 %550
  %554 = vset.pattern.permute.xlu0 0
  %555 = vperm.xlu0 %554, %v529
  %v556 = vpop.permute.xlu0 %555
  %559 = vset.pattern.permute.xlu0 0
  %560 = vperm.xlu0 %559, %v530
  %v561 = vpop.permute.xlu0 %560
  %564 = vset.pattern.permute.xlu0 0
  %565 = vperm.xlu0 %564, %v531
  %v566 = vpop.permute.xlu0 %565
  %569 = vset.pattern.permute.xlu0 0
  %570 = vperm.xlu0 %569, %v532
  %v571 = vpop.permute.xlu0 %570
  %574 = vset.pattern.permute.xlu0 0
  %575 = vperm.xlu0 %574, %v533
  %v576 = vpop.permute.xlu0 %575
  %579 = vset.pattern.permute.xlu0 0
  %580 = vperm.xlu0 %579, %v534
  %v581 = vpop.permute.xlu0 %580
  %584 = vset.pattern.permute.xlu0 0
  %585 = vperm.xlu0 %584, %v535
  %v586 = vpop.permute.xlu0 %585
  %589 = vset.pattern.permute.xlu0 0
  %590 = vperm.xlu0 %589, %v536
  %v591 = vpop.permute.xlu0 %590
  %594 = vset.pattern.permute.xlu0 0
  %595 = vperm.xlu0 %594, %v537
  %v596 = vpop.permute.xlu0 %595
  %599 = vset.pattern.permute.xlu0 0
  %600 = vperm.xlu0 %599, %v538
  %v601 = vpop.permute.xlu0 %600
  %604 = vset.pattern.permute.xlu0 0
  %605 = vperm.xlu0 %604, %v539
  %v606 = vpop.permute.xlu0 %605
  %609 = vset.pattern.permute.xlu0 0
  %610 = vperm.xlu0 %609, %v540
  %v611 = vpop.permute.xlu0 %610
  %614 = vset.pattern.permute.xlu0 0
  %615 = vperm.xlu0 %614, %v541
  %v616 = vpop.permute.xlu0 %615
  %619 = vset.pattern.permute.xlu0 0
  %620 = vperm.xlu0 %619, %v542
  %v621 = vpop.permute.xlu0 %620
  %v623 = vadd.f32 %v511, %v546
  %v624 = vadd.f32 %v512, %v551
  %v625 = vadd.f32 %v513, %v556
  %v626 = vadd.f32 %v514, %v561
  %v627 = vadd.f32 %v515, %v566
  %v628 = vadd.f32 %v516, %v571
  %v629 = vadd.f32 %v517, %v576
  %v630 = vadd.f32 %v518, %v581
  %v631 = vadd.f32 %v519, %v586
  %v632 = vadd.f32 %v520, %v591
  %v633 = vadd.f32 %v521, %v596
  %v634 = vadd.f32 %v522, %v601
  %v635 = vadd.f32 %v523, %v606
  %v636 = vadd.f32 %v524, %v611
  %v637 = vadd.f32 %v525, %v616
  %v638 = vadd.f32 %v526, %v621
  %639 = vst.msk [vmem:[%s3] sm:$0xff] %vm30, %v623
  %640 = vst.msk [vmem:[%s3 + $0x8] sm:$0xff] %vm30, %v624
  %641 = vst.msk [vmem:[%s3 + $0x10] sm:$0xff] %vm30, %v625
  %642 = vst.msk [vmem:[%s3 + $0x18] sm:$0xff] %vm30, %v626
  %643 = vst.msk [vmem:[%s3 + $0x20] sm:$0xff] %vm30, %v627
  %644 = vst.msk [vmem:[%s3 + $0x28] sm:$0xff] %vm30, %v628
  %645 = vst.msk [vmem:[%s3 + $0x30] sm:$0xff] %vm30, %v629
  %646 = vst.msk [vmem:[%s3 + $0x38] sm:$0xff] %vm30, %v630
  %647 = vst.msk [vmem:[%s3 + $0x40] sm:$0xff] %vm30, %v631
  %648 = vst.msk [vmem:[%s3 + $0x48] sm:$0xff] %vm30, %v632
  %649 = vst.msk [vmem:[%s3 + $0x50] sm:$0xff] %vm30, %v633
  %650 = vst.msk [vmem:[%s3 + $0x58] sm:$0xff] %vm30, %v634
  %651 = vst.msk [vmem:[%s3 + $0x60] sm:$0xff] %vm30, %v635
  %652 = vst.msk [vmem:[%s3 + $0x68] sm:$0xff] %vm30, %v636
  %653 = vst.msk [vmem:[%s3 + $0x70] sm:$0xff] %vm30, %v637
  %654 = vst.msk [vmem:[%s3 + $0x78] sm:$0xff] %vm30, %v638
  // Predicated region
  $region14: #{batchnorm2d.1} parent=0 // pred_check
    _
  $region15: #{batchnorm2d.1} parent=0 // pred_check_branch
    %656 = sbr.rel (0) target = $region17
  $region16: #{batchnorm2d.1} parent=0 // pred_region
    _
  $region17: #{batchnorm2d.1} parent=0 // pred_fallthru
    _
  // Predicated region
  $region18: #{batchnorm2d.1} parent=0 // pred_check
    _
  $region19: #{batchnorm2d.1} parent=0 // pred_check_branch
    %658 = sbr.rel (0) target = $region21
  $region20: #{batchnorm2d.1} parent=0 // pred_region
    _
  $region21: #{batchnorm2d.1} parent=0 // pred_fallthru
    _

</llo_original>
